<compile_context>
chip_gen: v7x
topology: tpu7x:2x2x1
jax: 0.10.0
libtpu: 0.0.40
codegen_flags: <defaults>
</compile_context>

<pallas_src>
import functools

import jax
import jax.numpy as jnp
from jax.experimental import pallas as pl
from jax.experimental.pallas import tpu as pltpu


def _round_up(x, m):
    return (x + m - 1) // m * m


def _bert_output_kernel(x_ref, res_ref, w_ref, p_ref, o_ref, *, eps, cast_dtype):
    # Cast the streamed activation tile to the matmul dtype in-kernel (no extra HBM pass).
    x = x_ref[...]
    if cast_dtype is not None and x.dtype != cast_dtype:
        x = x.astype(cast_dtype)
    # Dense: [tm, I] @ [I, H] on the MXU with f32 accumulation.
    h = jnp.dot(x, w_ref[...], preferred_element_type=jnp.float32)
    h = h + p_ref[0:1, :]                       # bias (f32, row 0 of fused param block)
    # Dropout in eval mode is the identity.
    # TODO(synk): training-mode dropout would need pltpu.prng_seed / prng_random_bits.
    h = h + res_ref[...].astype(jnp.float32)    # residual, upcast in-kernel
    # LayerNorm over the hidden dim, all math in f32.
    mean = jnp.mean(h, axis=-1, keepdims=True)
    centered = h - mean
    var = jnp.mean(centered * centered, axis=-1, keepdims=True)
    # Fold gamma into the rsqrt scale (one fewer full-tile VPU multiply).
    scale = jax.lax.rsqrt(var + eps) * p_ref[1:2, :]    # gamma (row 1)
    out = centered * scale + p_ref[2:3, :]              # beta  (row 2)
    o_ref[...] = out.astype(o_ref.dtype)


def bert_output(hidden_states, input_tensor, w, b, gamma, beta, *,
                eps=1e-12, tm=512, matmul_dtype=jnp.bfloat16,
                out_dtype=None, single_buffer_resident=True):
    """hidden_states: [B, S, I], input_tensor: [B, S, H] -> [B, S, H]."""
    B, S, I = hidden_states.shape
    H = input_tensor.shape[-1]
    n_rows = B * S
    if out_dtype is None:
        out_dtype = hidden_states.dtype

    # Stream x / residual in their native dtype (reshape is metadata-only).
    x2d = hidden_states.reshape(n_rows, I)
    r2d = input_tensor.reshape(n_rows, H)

    # Resident weight in the matmul dtype. Pre-cast your stored params (bf16) so this
    # branch is a no-op on the hot path.
    if matmul_dtype is not None and w.dtype != jnp.dtype(matmul_dtype):
        w_in = w.astype(matmul_dtype)
    else:
        w_in = w
    cast_dtype = None if matmul_dtype is None else jnp.dtype(matmul_dtype)

    # Fuse bias / gamma / beta into one resident (8, H) f32 block: single BlockSpec,
    # single prologue DMA, no per-(1,H) sublane padding waste. Tiny (8*H) wrapper op.
    params = jnp.zeros((8, H), jnp.float32)
    params = params.at[0].set(b.astype(jnp.float32))
    params = params.at[1].set(gamma.astype(jnp.float32))
    params = params.at[2].set(beta.astype(jnp.float32))

    # Physical VMEM cap (64 MiB/TC on v7x, 128 MiB on v5e/v6e) minus margin.
    try:
        vmem_cap = int(pltpu.get_tpu_info().vmem_capacity_bytes)
    except Exception:
        vmem_cap = 64 << 20
    vmem_cap = max(vmem_cap - (4 << 20), 16 << 20)

    def _buf_bytes(tm_):
        streamed = (tm_ * I * x2d.dtype.itemsize
                    + tm_ * H * r2d.dtype.itemsize
                    + tm_ * H * jnp.dtype(out_dtype).itemsize)
        resident = I * H * jnp.dtype(w_in.dtype).itemsize + 8 * H * 4
        return 2 * streamed, resident   # streamed tiles are double-buffered

    # Row tile: multiples of 16 rows (bf16 sublane packing); clamp to the row count so
    # tiny demos still work, keep >=2 grid steps when there is enough work (megacore),
    # and shrink until the working set fits physical VMEM (matters on v7x).
    tm_eff = min(tm, _round_up(n_rows, 16))
    if n_rows >= 256:
        tm_eff = min(tm_eff, _round_up(pl.cdiv(n_rows, 2), 128))
    while tm_eff > 128:
        streamed2, resident = _buf_bytes(tm_eff)
        if streamed2 + 2 * resident + (4 << 20) <= vmem_cap:
            break
        tm_eff = max(128, _round_up(tm_eff // 2, 16))

    streamed2, resident = _buf_bytes(tm_eff)
    grid = (pl.cdiv(n_rows, tm_eff),)   # ragged last block: Pallas masks the partial store

    kernel = functools.partial(_bert_output_kernel, eps=eps, cast_dtype=cast_dtype)

    def run(use_single_buffer_resident):
        resident_bufs = 1 if use_single_buffer_resident else 2
        vmem_limit = int(streamed2 + resident_bufs * resident + (4 << 20))
        vmem_limit = min(max(vmem_limit, 16 << 20), vmem_cap)

        def resident_spec(shape):
            if use_single_buffer_resident:
                # Constant index_map -> double-buffering buys nothing; save the 2nd copy.
                return pl.BlockSpec(shape, lambda i: (0, 0), pipeline_mode=pl.Buffered(1))
            return pl.BlockSpec(shape, lambda i: (0, 0))

        return pl.pallas_call(
            kernel,
            out_shape=jax.ShapeDtypeStruct((n_rows, H), out_dtype),
            grid_spec=pltpu.PrefetchScalarGridSpec(
                num_scalar_prefetch=0,
                grid=grid,
                in_specs=[
                    pl.BlockSpec((tm_eff, I), lambda i: (i, 0)),   # activation tile (streamed)
                    pl.BlockSpec((tm_eff, H), lambda i: (i, 0)),   # residual tile (streamed)
                    resident_spec((I, H)),                         # dense weight (resident)
                    resident_spec((8, H)),                         # fused bias/gamma/beta
                ],
                out_specs=pl.BlockSpec((tm_eff, H), lambda i: (i, 0)),  # lane-dense H output
            ),
            compiler_params=pltpu.CompilerParams(
                dimension_semantics=("parallel",),  # megacore-shard the row-tile axis
                vmem_limit_bytes=vmem_limit,
            ),
        )(x2d, r2d, w_in, params)

    try:
        out2d = run(single_buffer_resident)
    except (TypeError, ValueError, NotImplementedError, pltpu.LoweringException):
        if not single_buffer_resident:
            raise
        # Narrow fallback: only if this JAX build rejects Buffered(1) block specs.
        out2d = run(False)

    return out2d.reshape(B, S, H)


if __name__ == "__main__":
    # Small, module-consistent shapes: batch=2, seq=8, hidden=32, intermediate=64.
    B, S, H, I = 2, 8, 32, 64
    eps = 1e-12

    key = jax.random.PRNGKey(0)
    k1, k2, k3, k4 = jax.random.split(key, 4)

    hidden_states = jax.random.normal(k1, (B, S, I), dtype=jnp.float32)
    input_tensor = jax.random.normal(k2, (B, S, H), dtype=jnp.float32)

    # Deterministic parameter init (nn.Linear-like uniform, LN gamma=1 beta=0).
    bound = 1.0 / (I ** 0.5)
    w = jax.random.uniform(k3, (I, H), minval=-bound, maxval=bound, dtype=jnp.float32)
    b = jax.random.uniform(k4, (H,), minval=-bound, maxval=bound, dtype=jnp.float32)
    gamma = jnp.ones((H,), dtype=jnp.float32)
    beta = jnp.zeros((H,), dtype=jnp.float32)

    # Pure-JAX f32 reference.
    ref_h = hidden_states @ w + b + input_tensor
    mu = ref_h.mean(-1, keepdims=True)
    var = ((ref_h - mu) ** 2).mean(-1, keepdims=True)
    ref = (ref_h - mu) / jnp.sqrt(var + eps) * gamma + beta

    # f32 matmul path: must match the f32 reference tightly.
    out_f32 = bert_output(hidden_states, input_tensor, w, b, gamma, beta,
                          eps=eps, matmul_dtype=None)
    out_f32 = jax.block_until_ready(out_f32)
    assert jnp.allclose(out_f32, ref, atol=1e-5, rtol=1e-5), "f32 kernel mismatch vs reference"

    # bf16 matmul path (production/perf config): weight pre-cast ONCE outside the call
    # (store params in bf16 in a real model); looser tolerance for bf16 matmul inputs.
    w_bf16 = w.astype(jnp.bfloat16)
    out_bf16 = bert_output(hidden_states, input_tensor, w_bf16, b, gamma, beta,
                           eps=eps, matmul_dtype=jnp.bfloat16)
    out_bf16 = jax.block_until_ready(out_bf16)
    assert jnp.allclose(out_bf16, ref, atol=3e-2, rtol=3e-2), "bf16 kernel mismatch vs reference"

    print("KERNEL_OK")
</pallas_src>

<mosaic_0001>
module attributes {stable_mosaic.version = 11 : i64} {
  func.func @_bert_output_kernel(%arg0: i32, %arg1: memref<16x64xf32, #tpu.memory_space<vmem>>, %arg2: memref<16x32xf32, #tpu.memory_space<vmem>>, %arg3: memref<64x32xf32, #tpu.memory_space<vmem>>, %arg4: memref<8x32xf32, #tpu.memory_space<vmem>>, %arg5: memref<16x32xf32, #tpu.memory_space<vmem>>) attributes {dimension_semantics = [#tpu.dimension_semantics<parallel>], iteration_bounds = array<i64: 1>, scalar_prefetch = 0 : i64, scratch_operands = 0 : i64, tpu.core_type = #tpu.core_type<tc>, window_params = [{transform_indices = @transform_0, window_bounds = array<i64: 16, 64>}, {transform_indices = @transform_1, window_bounds = array<i64: 16, 32>}, {pipeline_mode = #tpu.pipeline_mode<synchronous>, transform_indices = @transform_2, window_bounds = array<i64: 64, 32>}, {pipeline_mode = #tpu.pipeline_mode<synchronous>, transform_indices = @transform_3, window_bounds = array<i64: 8, 32>}, {transform_indices = @transform_4, window_bounds = array<i64: 16, 32>}]} {
    %c0 = arith.constant 0 : index
    %c0_0 = arith.constant 0 : index
    %0 = vector.load %arg1[%c0, %c0_0] : memref<16x64xf32, #tpu.memory_space<vmem>>, vector<16x64xf32>
    %c0_1 = arith.constant 0 : index
    %c0_2 = arith.constant 0 : index
    %1 = vector.load %arg3[%c0_1, %c0_2] : memref<64x32xf32, #tpu.memory_space<vmem>>, vector<64x32xf32>
    %cst = arith.constant dense<0.000000e+00> : vector<16x32xf32>
    %2 = tpu.matmul %0, %1, %cst {dimension_numbers = #tpu.dot_dimension_numbers<[1], [0], [0], [1], [0, 0, 1, 1], [], []>} : vector<16x64xf32>, vector<64x32xf32>, vector<16x32xf32> -> vector<16x32xf32>
    %c0_3 = arith.constant 0 : index
    %c0_4 = arith.constant 0 : index
    %3 = vector.load %arg4[%c0_3, %c0_4] : memref<8x32xf32, #tpu.memory_space<vmem>>, vector<1x32xf32>
    %4 = vector.broadcast %3 : vector<1x32xf32> to vector<16x32xf32>
    %5 = arith.addf %2, %4 : vector<16x32xf32>
    %c0_5 = arith.constant 0 : index
    %c0_6 = arith.constant 0 : index
    %6 = vector.load %arg2[%c0_5, %c0_6] : memref<16x32xf32, #tpu.memory_space<vmem>>, vector<16x32xf32>
    %7 = arith.addf %5, %6 : vector<16x32xf32>
    %cst_7 = arith.constant dense<0.000000e+00> : vector<16xf32>
    %8 = vector.multi_reduction <add>, %7, %cst_7 [1] : vector<16x32xf32> to vector<16xf32>
    %9 = vector.shape_cast %8 : vector<16xf32> to vector<16x1xf32>
    %cst_8 = arith.constant 3.200000e+01 : f32
    %10 = vector.broadcast %cst_8 : f32 to vector<16x1xf32>
    %11 = arith.divf %9, %10 : vector<16x1xf32>
    %12 = vector.broadcast %11 : vector<16x1xf32> to vector<16x32xf32>
    %13 = arith.subf %7, %12 : vector<16x32xf32>
    %14 = arith.mulf %13, %13 : vector<16x32xf32>
    %cst_9 = arith.constant dense<0.000000e+00> : vector<16xf32>
    %15 = vector.multi_reduction <add>, %14, %cst_9 [1] : vector<16x32xf32> to vector<16xf32>
    %16 = vector.shape_cast %15 : vector<16xf32> to vector<16x1xf32>
    %cst_10 = arith.constant 3.200000e+01 : f32
    %17 = vector.broadcast %cst_10 : f32 to vector<16x1xf32>
    %18 = arith.divf %16, %17 : vector<16x1xf32>
    %cst_11 = arith.constant 9.99999996E-13 : f32
    %19 = vector.broadcast %cst_11 : f32 to vector<16x1xf32>
    %20 = arith.addf %18, %19 : vector<16x1xf32>
    %21 = math.rsqrt %20 : vector<16x1xf32>
    %c1 = arith.constant 1 : index
    %c0_12 = arith.constant 0 : index
    %22 = vector.load %arg4[%c1, %c0_12] : memref<8x32xf32, #tpu.memory_space<vmem>>, vector<1x32xf32>
    %23 = vector.broadcast %21 : vector<16x1xf32> to vector<16x32xf32>
    %24 = vector.broadcast %22 : vector<1x32xf32> to vector<16x32xf32>
    %25 = arith.mulf %23, %24 : vector<16x32xf32>
    %26 = arith.mulf %13, %25 : vector<16x32xf32>
    %c2 = arith.constant 2 : index
    %c0_13 = arith.constant 0 : index
    %27 = vector.load %arg4[%c2, %c0_13] : memref<8x32xf32, #tpu.memory_space<vmem>>, vector<1x32xf32>
    %28 = vector.broadcast %27 : vector<1x32xf32> to vector<16x32xf32>
    %29 = arith.addf %26, %28 : vector<16x32xf32>
    %c0_14 = arith.constant 0 : index
    %c0_15 = arith.constant 0 : index
    %30 = vector.load %arg5[%c0_14, %c0_15] : memref<16x32xf32, #tpu.memory_space<vmem>>, vector<16x32xf32>
    tpu.vector_store %arg5[%c0_14, %c0_15], %29 {strides = array<i32>} : memref<16x32xf32, #tpu.memory_space<vmem>>, vector<16x32xf32>,
    return
  }
  func.func @transform_0(%arg0: i32) -> (i32, i32) {
    %c0_i32 = arith.constant 0 : i32
    %c0_i32_0 = arith.constant 0 : i32
    return %arg0, %c0_i32 : i32, i32
  }
  func.func @transform_1(%arg0: i32) -> (i32, i32) {
    %c0_i32 = arith.constant 0 : i32
    %c0_i32_0 = arith.constant 0 : i32
    return %arg0, %c0_i32 : i32, i32
  }
  func.func @transform_2(%arg0: i32) -> (i32, i32) {
    %c0_i32 = arith.constant 0 : i32
    %c0_i32_0 = arith.constant 0 : i32
    %c0_i32_1 = arith.constant 0 : i32
    return %c0_i32, %c0_i32_0 : i32, i32
  }
  func.func @transform_3(%arg0: i32) -> (i32, i32) {
    %c0_i32 = arith.constant 0 : i32
    %c0_i32_0 = arith.constant 0 : i32
    %c0_i32_1 = arith.constant 0 : i32
    return %c0_i32, %c0_i32_0 : i32, i32
  }
  func.func @transform_4(%arg0: i32) -> (i32, i32) {
    %c0_i32 = arith.constant 0 : i32
    %c0_i32_0 = arith.constant 0 : i32
    return %arg0, %c0_i32 : i32, i32
  }
}

</mosaic_0001>

<llo_original>
// kernel: tpu_custom_call.1
$region0: #{tpu_custom_call.1}
  #allocation0 [shape = 'u32[]', space=smem, size = 0x4, offset = 0x4, fixed_abs, tag = 'smem constant byte address 0x4 - core index']
  #allocation1 [shape = 'u32[144,128]{1,0:T(1,128)}', space=vmem, size = 0x12000, scoped, tag = 'internal scratch']
  %s0 = inlined_call_operand.vmem [shape: f32[16,64], index: 0, kind: input, shape index: {}]
  %s1 = inlined_call_operand.vmem [shape: f32[16,32], index: 1, kind: input, shape index: {}]
  %s2 = inlined_call_operand.vmem [shape: f32[64,32], index: 2, kind: input, shape index: {}]
  %s3 = inlined_call_operand.vmem [shape: f32[8,32], index: 3, kind: input, shape index: {}]
  %s4 = inlined_call_operand.hbm [shape: f32[16,32], index: 4, kind: output, shape index: {}]
  %s5 = sld [smem:[#allocation0]]
  $region26: #{tpu_custom_call.1} parent=0
    _
  %s7 = ssub.s32 1, %s5
  %s8 = scalar_select 0, %s7, %s5
  $region1: #{tpu_custom_call.1} parent=0
    #allocation2 [shape = 'u8[8192]{0}', space=vmem, size = 0x2000, scoped, tag = 'output window, operand 0, single buffered']
    #allocation3 [shape = 's32[1]{0}', space=sflag, size = 0x4, scoped, tag = 'scoped memory for tpu_custom_call.1']
    %9 = vsyncpa [#allocation3], 0
    // Predicated region
    $region2: #{tpu_custom_call.1} parent=1 // pred_check
      _
    $region3: #{tpu_custom_call.1} parent=1 // pred_check_branch
      %11 = sbr.rel (0) target = $region5
    $region4: #{tpu_custom_call.1} parent=1 // pred_region
      _
    $region5: #{tpu_custom_call.1} parent=1 // pred_fallthru
      _
    // Predicated region
    $region6: #{tpu_custom_call.1} parent=1 // pred_check
      _
    $region7: #{tpu_custom_call.1} parent=1 // pred_check_branch
      %13 = sbr.rel (0) target = $region9
    $region8: #{tpu_custom_call.1} parent=1 // pred_region
      _
    $region9: #{tpu_custom_call.1} parent=1 // pred_fallthru
      _
    // Predicated region
    $region10: #{tpu_custom_call.1} parent=1 // pred_check
      _
    $region11: #{tpu_custom_call.1} parent=1 // pred_check_branch
      %15 = sbr.rel (0) target = $region13
    $region12: #{tpu_custom_call.1} parent=1 // pred_region
      _
    $region13: #{tpu_custom_call.1} parent=1 // pred_fallthru
      _
    // Predicated region
    $region14: #{tpu_custom_call.1} parent=1 // pred_check
      _
    $region15: #{tpu_custom_call.1} parent=1 // pred_check_branch
      %17 = sbr.rel (0) target = $region17
    $region16: #{tpu_custom_call.1} parent=1 // pred_region
      _
    $region17: #{tpu_custom_call.1} parent=1 // pred_fallthru
      _
    %v18 = vld [vmem:[%s0] sm:$0xff]
    %v19 = vld [vmem:[%s0 + $0x8] sm:$0xff]
    %v20 = vld [vmem:[%s2] sm:$0xff]
    %v21 = vld [vmem:[%s2 + $0x8] sm:$0xff]
    %v22 = vld [vmem:[%s2 + $0x10] sm:$0xff]
    %v23 = vld [vmem:[%s2 + $0x18] sm:$0xff]
    %v24 = vld [vmem:[%s2 + $0x20] sm:$0xff]
    %v25 = vld [vmem:[%s2 + $0x28] sm:$0xff]
    %v26 = vld [vmem:[%s2 + $0x30] sm:$0xff]
    %v27 = vld [vmem:[%s2 + $0x38] sm:$0xff]
    %v28 = vld [vmem:[%s3] sm:$0x1]
    %v29 = vlaneseq
    %v30 = vshrl.u32 %v29, 7
    %v31 = vsub.s32 0, %v30
    %v32 = vrot.slane %v28, %v31
    %vm33 = vcmask 523264
    %v35 = vsel %vm33, %v18, 0
    %v38 = vsel %vm33, %v19, 0
    %40 = vmatprep.subr.mxu0 0.0
    %41 = vmatpush1.msra.mxu0 %v20
    %42 = vmatprep.subr.mxu0 0.0
    %43 = vmatpush1.msra.mxu0 %v21
    %44 = vmatprep.subr.mxu0 0.0
    %45 = vmatpush1.msra.mxu0 %v22
    %46 = vmatprep.subr.mxu0 0.0
    %47 = vmatpush1.msra.mxu0 %v23
    %48 = vmatprep.subr.mxu0 0.0
    %49 = vmatpush1.msra.mxu0 %v24
    %50 = vmatprep.subr.mxu0 0.0
    %51 = vmatpush1.msra.mxu0 %v25
    %52 = vmatprep.subr.mxu0 0.0
    %53 = vmatpush1.msra.mxu0 %v26
    %54 = vmatprep.subr.mxu0 0.0
    %55 = vmatpush1.msra.mxu0 %v27
    %56 = vmatprep.subr.mxu0 0.0
    %57 = vmatpush1.msra.mxu0 0.0
    %58 = vmatprep.subr.mxu0 0.0
    %59 = vmatpush1.msra.mxu0 0.0
    %60 = vmatprep.subr.mxu0 0.0
    %61 = vmatpush1.msra.mxu0 0.0
    %62 = vmatprep.subr.mxu0 0.0
    %63 = vmatpush1.msra.mxu0 0.0
    %64 = vmatprep.subr.mxu0 0.0
    %65 = vmatpush1.msra.mxu0 0.0
    %66 = vmatprep.subr.mxu0 0.0
    %67 = vmatpush1.msra.mxu0 0.0
    %68 = vmatprep.subr.mxu0 0.0
    %69 = vmatpush1.msra.mxu0 0.0
    %70 = vmatprep.subr.mxu0 0.0
    %71 = vmatpush1.msra.mxu0 0.0
    %72 = vmatprep.subr.mxu0 0.0
    %73 = vmatpush1.msra.mxu0 0.0
    %74 = vmatprep.subr.mxu0 0.0
    %75 = vmatpush1.msra.mxu0 0.0
    %76 = vmatprep.subr.mxu0 0.0
    %77 = vmatpush1.msra.mxu0 0.0
    %78 = vmatprep.subr.mxu0 0.0
    %79 = vmatpush1.msra.mxu0 0.0
    %80 = vmatprep.subr.mxu0 0.0
    %81 = vmatpush1.msra.mxu0 0.0
    %82 = vmatprep.subr.mxu0 0.0
    %83 = vmatpush1.msra.mxu0 0.0
    %84 = vmatprep.subr.mxu0 0.0
    %85 = vmatpush1.msra.mxu0 0.0
    %86 = vmatprep.subr.mxu0 0.0
    %87 = vmatpush1.msra.mxu0 0.0
    %88 = vmatprep.subr.mxu0 0.0
    %89 = vmatpush1.msra.mxu0 0.0
    %90 = vmatprep.subr.mxu0 0.0
    %91 = vmatpush1.msra.mxu0 0.0
    %92 = vmatprep.subr.mxu0 0.0
    %93 = vmatpush1.msra.mxu0 0.0
    %94 = vmatprep.subr.mxu0 0.0
    %95 = vmatpush1.msra.mxu0 0.0
    %96 = vmatprep.subr.mxu0 0.0
    %97 = vmatpush1.msra.mxu0 0.0
    %98 = vmatprep.subr.mxu0 0.0
    %99 = vmatpush1.msra.mxu0 0.0
    %100 = vmatprep.subr.mxu0 0.0
    %101 = vmatpush1.msra.mxu0 0.0
    %102 = vmatprep.subr.mxu0 0.0
    %103 = vmatpush1.msra.mxu0 0.0
    %104 = vmatprep.mubr.f32.mxu0 0.0
    %105 = vmatmul.mubr.f32.gmra.mrb[0].mxu0 %v35
    %v106 = vpop.f32.mrb[0].mxu0
    %v107 = vadd.f32 %v32, %v106
    %v108 = vpop.f32.mrb[0].mxu0
    %109 = vmatprep.mubr.f32.mxu0 0.0
    %110 = vmatmul.mubr.f32.gmra.mrb[0].mxu0 %v38
    %v111 = vpop.f32.mrb[0].mxu0
    %v112 = vadd.f32 %v32, %v111
    %v113 = vpop.f32.mrb[0].mxu0
    %114 = vdwg.mxu0
    %v115 = vld [vmem:[%s1] sm:$0xff]
    %v116 = vld [vmem:[%s1 + $0x8] sm:$0xff]
    %v117 = vadd.f32 %v107, %v115
    %v118 = vadd.f32 %v112, %v116
    %vm119 = vcmask 261120
    %v120 = vsel %vm119, %v117, 0.0
    %121 = vadd.xlane.f32.xlu0 %v120
    %v122 = vpop.xlane.xlu0 %121
    %v123 = vsel %vm119, %v118, 0.0
    %124 = vadd.xlane.f32.xlu0 %v123
    %v125 = vpop.xlane.xlu0 %124
    %v126 = vrcp.pop 32.0
    %v127 = vmul.f32 %v122, %v126
    %v128 = vmul.f32 %v125, %v126
    %v129 = vsub.f32 %v117, %v127
    %v130 = vsub.f32 %v118, %v128
    %v131 = vmul.f32 %v129, %v129
    %v132 = vmul.f32 %v130, %v130
    %v133 = vsel %vm119, %v131, 0.0
    %134 = vadd.xlane.f32.xlu0 %v133
    %v135 = vpop.xlane.xlu0 %134
    %v136 = vsel %vm119, %v132, 0.0
    %137 = vadd.xlane.f32.xlu0 %v136
    %v138 = vpop.xlane.xlu0 %137
    %v139 = vmul.f32 %v135, %v126
    %v140 = vmul.f32 %v138, %v126
    %v141 = vadd.f32 %v139, 1e-12
    %v142 = vadd.f32 %v140, 1e-12
    %v143 = vrsqrt.pop %v141
    %v144 = vrsqrt.pop %v142
    %v145 = vld [vmem:[%s3 + $0x1] sm:$0x1]
    %v146 = vlaneseq
    %v147 = vshrl.u32 %v146, 7
    %v148 = vsub.s32 0, %v147
    %v149 = vrot.slane %v145, %v148
    %v150 = vmul.f32 %v143, %v149
    %v151 = vmul.f32 %v144, %v149
    %v152 = vmul.f32 %v129, %v150
    %v153 = vmul.f32 %v130, %v151
    %v154 = vld [vmem:[%s3 + $0x2] sm:$0x1]
    %v155 = vlaneseq
    %v156 = vshrl.u32 %v155, 7
    %v157 = vsub.s32 0, %v156
    %v158 = vrot.slane %v154, %v157
    %v159 = vadd.f32 %v152, %v158
    %v160 = vadd.f32 %v153, %v158
    %161 = vst.msk [vmem:[#allocation2] sm:$0xff] %vm119, %v159
    %162 = vst.msk [vmem:[#allocation2 + $0x8] sm:$0xff] %vm119, %v160
    // Predicated region
    $region18: #{tpu_custom_call.1} parent=1 // pred_check
      _
    $region19: #{tpu_custom_call.1} parent=1 // pred_check_branch
      %164 = sbr.rel (0) target = $region21
    $region20: #{tpu_custom_call.1} parent=1 // pred_region
      %s166 = ssub.s32 256, 256
      %167 = vsyncadd [#allocation3], %s166
      %s168 = sshll.u32 [#allocation2], 4
      %s169 = int_to_ptr.vmem [resolvable:$true] %s168
      %174 = dma.vmem_to_hbm [thread:$0]  %s169, 256, %s4, [#allocation3], 128, 128, 8
    $region21: #{tpu_custom_call.1} parent=1 // pred_fallthru
      _
    // Predicated region
    $region22: #{tpu_custom_call.1} parent=1 // pred_check
      _
    $region23: #{tpu_custom_call.1} parent=1 // pred_check_branch
      %176 = sbr.rel (0) target = $region25
    $region24: #{tpu_custom_call.1} parent=1 // pred_region
      %177 = dma.done [#allocation3], 256
    $region25: #{tpu_custom_call.1} parent=1 // pred_fallthru
      _
    %178 = vsyncpa [#allocation3], 1

</llo_original>
